<compile_context>
chip_gen: v5e
topology: v5e:2x2
jax: 0.10.0
libtpu: 0.0.40
codegen_flags: <defaults>
</compile_context>

<pallas_src>
import jax
import jax.numpy as jnp
from jax.experimental import pallas as pl
from jax.experimental.pallas import tpu as pltpu


# -----------------------------------------------------------------------------
# helpers
# -----------------------------------------------------------------------------
def _round_up(x, m):
    return ((x + m - 1) // m) * m


def _pad2d(a, rows, cols):
    pr, pc = rows - a.shape[0], cols - a.shape[1]
    if pr or pc:
        a = jnp.pad(a, ((0, pr), (0, pc)))
    return a


def _choose_tm(batch):
    """Batch-tile size: minimize padding waste & amortize per-step overhead."""
    b16 = _round_up(max(batch, 1), 16)
    if b16 <= 32:
        # tiny batch: single grid step (kernel is overhead-bound, not MXU-bound)
        return b16
    if b16 <= 512:
        # two tiles so v7x's second TensorCore gets work; harmless on 1-TC chips
        return _round_up((b16 + 1) // 2, 16)
    # large batch: biggest tile whose padding waste is < TM/2
    for tm in (512, 256, 128):
        if _round_up(batch, tm) - batch < tm // 2:
            return tm
    return 128


# -----------------------------------------------------------------------------
# Pallas kernel: fused (Linear -> ReLU)* -> [Dropout: identity] -> Linear
# One grid step processes a (TM, ·) batch tile; weights stay resident in VMEM.
# -----------------------------------------------------------------------------
def make_encoder_kernel(num_linear):
    def kernel(*refs):
        x_ref = refs[0]
        out_ref = refs[-1]
        wb = refs[1:-1]                      # (w0, b0, w1, b1, ...)

        # bf16 cast in-kernel (free VPU slot) instead of a wrapper HBM pass.
        h = x_ref[...].astype(jnp.bfloat16)
        for li in range(num_linear):
            w_ref, b_ref = wb[2 * li], wb[2 * li + 1]
            # bf16 operands on the MXU, f32 accumulation.
            y = jnp.dot(h, w_ref[...], preferred_element_type=jnp.float32)
            y = y + b_ref[...]               # f32 epilogue on the VPU
            if li < num_linear - 1:
                # ReLU in f32, re-pack to bf16 for the next matmul.
                h = jnp.maximum(y, 0.0).astype(jnp.bfloat16)
            else:
                # Dropout(p=0.1): identity in eval mode (no-op).
                out_ref[...] = y.astype(out_ref.dtype)
    return kernel


# -----------------------------------------------------------------------------
# One-time parameter preparation (outside the per-call hot path)
# -----------------------------------------------------------------------------
def prepare_encoder_params(params):
    """Pad (lane-dense) + cast weights to bf16 once.

    Layer 0 keeps its K dim unpadded (it multiplies the unpadded x features);
    deeper layers pad K to the previous layer's padded output width. All N dims
    pad to multiples of 128 (lane-dense, zero-preserving through bias + ReLU).
    Returns (prepared_params, layer_dims) with layer_dims[i] = (K_i, N_i).
    """
    num_linear = len(params) // 2
    prepared, layer_dims = [], []
    for li in range(num_linear):
        w = params[2 * li]
        b = params[2 * li + 1].reshape(1, -1)
        k = w.shape[0] if li == 0 else _round_up(w.shape[0], 128)
        n = _round_up(w.shape[1], 128)
        prepared.append(_pad2d(w, k, n).astype(jnp.bfloat16))
        prepared.append(_pad2d(b, 1, n).astype(jnp.float32))
        layer_dims.append((k, n))
    return tuple(prepared), tuple(layer_dims)


# -----------------------------------------------------------------------------
# Wrapper: batch tiling, pallas_call, and mu/logvar split
# -----------------------------------------------------------------------------
def encoder_forward(x, prepared, layer_dims, out_dim, out_dtype=jnp.float32):
    batch, in_dims = x.shape
    num_linear = len(prepared) // 2
    assert layer_dims[0][0] == in_dims
    out_p = layer_dims[-1][1]
    out_cols = 2 * out_dim

    TM = _choose_tm(batch)
    batch_p = _round_up(batch, TM)
    grid = (batch_p // TM,)

    # Only the batch dim is padded (f32, feature dim left unpadded).
    x_p = _pad2d(x, batch_p, in_dims) if batch_p != batch else x

    def build_and_call(single_buffer_weights):
        w_kwargs = (dict(pipeline_mode=pl.Buffered(1))
                    if single_buffer_weights else {})
        in_specs = [pl.BlockSpec((TM, in_dims), lambda i: (i, 0))]
        for li in range(num_linear):
            k, n = layer_dims[li]
            in_specs.append(pl.BlockSpec((k, n), lambda i: (0, 0), **w_kwargs))
            in_specs.append(pl.BlockSpec((1, n), lambda i: (0, 0), **w_kwargs))
        out_specs = pl.BlockSpec((TM, out_p), lambda i: (i, 0))

        # Accurate VMEM budget: resident weights (1x if single-buffered) +
        # double-buffered x/out tiles + f32/bf16 intermediate working set.
        out_isz = jnp.dtype(out_dtype).itemsize
        weight_mult = 1 if single_buffer_weights else 2
        weight_bytes = weight_mult * sum(int(p.size) * p.dtype.itemsize
                                         for p in prepared)
        x_tile_bytes = 2 * TM * in_dims * 4
        out_tile_bytes = 2 * TM * out_p * out_isz
        max_n = max(n for _, n in layer_dims)
        interm_bytes = 2 * TM * max_n * 4
        vmem_budget = (weight_bytes + x_tile_bytes + out_tile_bytes
                       + interm_bytes + (2 << 20))
        try:
            cap = int(pltpu.get_tpu_info().vmem_capacity_bytes) * 3 // 4
        except Exception:
            cap = 48 << 20                   # safe on v7x (64 MiB per TC)
        vmem_budget = max(min(vmem_budget, cap), 8 << 20)

        # Advisory cost estimate for XLA's scheduler.
        flops = 2 * batch_p * sum(k * n for k, n in layer_dims)
        bytes_accessed = (int(x_p.size) * 4
                          + sum(int(p.size) * p.dtype.itemsize for p in prepared)
                          + batch_p * out_p * out_isz)

        return pl.pallas_call(
            make_encoder_kernel(num_linear),
            out_shape=jax.ShapeDtypeStruct((batch_p, out_p), out_dtype),
            grid_spec=pltpu.PrefetchScalarGridSpec(
                num_scalar_prefetch=0,
                grid=grid,
                in_specs=in_specs,
                out_specs=out_specs,
            ),
            compiler_params=pltpu.CompilerParams(
                dimension_semantics=("parallel",),
                vmem_limit_bytes=int(vmem_budget),
            ),
            cost_estimate=pl.CostEstimate(
                flops=int(flops), transcendentals=0,
                bytes_accessed=int(bytes_accessed)),
        )(x_p, *prepared)

    try:
        y_p = build_and_call(True)           # single-buffered resident weights
    except Exception:
        y_p = build_and_call(False)          # fallback: default double-buffering

    # Strip batch / lane padding, then split like the PyTorch forward.
    y = y_p[:batch, :out_cols]
    return y[:, :out_dim], y[:, out_dim:]


# -----------------------------------------------------------------------------
# Deterministic parameter initialization (shapes from Encoder.__init__)
# -----------------------------------------------------------------------------
def init_params(key, in_dims, hidden_dims, out_dim):
    dims = [in_dims] + list(hidden_dims) + [out_dim * 2]
    params = []
    for i in range(len(dims) - 1):
        key, kw, kb = jax.random.split(key, 3)
        fan_in, fan_out = dims[i], dims[i + 1]
        bound = 1.0 / (fan_in ** 0.5)        # mimic nn.Linear default init range
        w = jax.random.uniform(kw, (fan_in, fan_out), jnp.float32, -bound, bound)
        b = jax.random.uniform(kb, (1, fan_out), jnp.float32, -bound, bound)
        params.extend([w, b])
    return tuple(params)


# -----------------------------------------------------------------------------
# Pure-JAX references for verification
# -----------------------------------------------------------------------------
def encoder_ref(x, params, out_dim, bf16=True):
    num_linear = len(params) // 2
    h = x
    for li in range(num_linear):
        w, b = params[2 * li], params[2 * li + 1]
        lhs = h.astype(jnp.bfloat16) if bf16 else h
        rhs = w.astype(jnp.bfloat16) if bf16 else w
        y = jnp.dot(lhs, rhs, preferred_element_type=jnp.float32) + b
        h = jnp.maximum(y, 0.0) if li < num_linear - 1 else y
    return h[:, :out_dim], h[:, out_dim:2 * out_dim]


if __name__ == "__main__":
    # Small shapes consistent with the module: flat feature input [batch, in_dims]
    batch = 2
    in_dims = 16
    hidden_dims = [32, 32]
    out_dim = 8

    key = jax.random.PRNGKey(0)
    key, kx = jax.random.split(key)
    x = jax.random.normal(kx, (batch, in_dims), dtype=jnp.float32)

    params = init_params(key, in_dims, hidden_dims, out_dim)

    # Pad/cast the parameters once (outside the per-call hot path).
    prepared, layer_dims = prepare_encoder_params(params)

    mu, logvar = encoder_forward(x, prepared, layer_dims, out_dim)
    mu = jax.block_until_ready(mu)
    logvar = jax.block_until_ready(logvar)

    assert mu.shape == (batch, out_dim) and logvar.shape == (batch, out_dim)

    # Verify against a bf16-emulating JAX reference (same mixed precision)...
    mu_bf, lv_bf = encoder_ref(x, params, out_dim, bf16=True)
    assert jnp.allclose(mu, mu_bf, atol=2e-3, rtol=2e-3)
    assert jnp.allclose(logvar, lv_bf, atol=2e-3, rtol=2e-3)

    # ...and sanity-check against the full-f32 reference with bf16 tolerance.
    mu_f32, lv_f32 = encoder_ref(x, params, out_dim, bf16=False)
    assert jnp.allclose(mu, mu_f32, atol=5e-2, rtol=5e-2)
    assert jnp.allclose(logvar, lv_f32, atol=5e-2, rtol=5e-2)

    print("KERNEL_OK")
</pallas_src>

<mosaic_0001>
module attributes {stable_mosaic.version = 11 : i64} {
  func.func @kernel(%arg0: i32, %arg1: memref<16x16xf32, #tpu.memory_space<vmem>>, %arg2: memref<16x128xbf16, #tpu.memory_space<vmem>>, %arg3: memref<1x128xf32, #tpu.memory_space<vmem>>, %arg4: memref<128x128xbf16, #tpu.memory_space<vmem>>, %arg5: memref<1x128xf32, #tpu.memory_space<vmem>>, %arg6: memref<128x128xbf16, #tpu.memory_space<vmem>>, %arg7: memref<1x128xf32, #tpu.memory_space<vmem>>, %arg8: memref<16x128xf32, #tpu.memory_space<vmem>>) attributes {dimension_semantics = [#tpu.dimension_semantics<parallel>], iteration_bounds = array<i64: 1>, scalar_prefetch = 0 : i64, scratch_operands = 0 : i64, tpu.core_type = #tpu.core_type<tc>, window_params = [{transform_indices = @transform_0, window_bounds = array<i64: 16, 16>}, {pipeline_mode = #tpu.pipeline_mode<synchronous>, transform_indices = @transform_1, window_bounds = array<i64: 16, 128>}, {pipeline_mode = #tpu.pipeline_mode<synchronous>, transform_indices = @transform_2, window_bounds = array<i64: 1, 128>}, {pipeline_mode = #tpu.pipeline_mode<synchronous>, transform_indices = @transform_3, window_bounds = array<i64: 128, 128>}, {pipeline_mode = #tpu.pipeline_mode<synchronous>, transform_indices = @transform_4, window_bounds = array<i64: 1, 128>}, {pipeline_mode = #tpu.pipeline_mode<synchronous>, transform_indices = @transform_5, window_bounds = array<i64: 128, 128>}, {pipeline_mode = #tpu.pipeline_mode<synchronous>, transform_indices = @transform_6, window_bounds = array<i64: 1, 128>}, {transform_indices = @transform_7, window_bounds = array<i64: 16, 128>}]} {
    %c0 = arith.constant 0 : index
    %c0_0 = arith.constant 0 : index
    %0 = vector.load %arg1[%c0, %c0_0] : memref<16x16xf32, #tpu.memory_space<vmem>>, vector<16x16xf32>
    %1 = arith.truncf %0 : vector<16x16xf32> to vector<16x16xbf16>
    %c0_1 = arith.constant 0 : index
    %c0_2 = arith.constant 0 : index
    %2 = vector.load %arg2[%c0_1, %c0_2] : memref<16x128xbf16, #tpu.memory_space<vmem>>, vector<16x128xbf16>
    %cst = arith.constant dense<0.000000e+00> : vector<16x128xf32>
    %3 = tpu.matmul %1, %2, %cst {dimension_numbers = #tpu.dot_dimension_numbers<[1], [0], [0], [1], [0, 0, 1, 1], [], []>} : vector<16x16xbf16>, vector<16x128xbf16>, vector<16x128xf32> -> vector<16x128xf32>
    %c0_3 = arith.constant 0 : index
    %c0_4 = arith.constant 0 : index
    %4 = vector.load %arg3[%c0_3, %c0_4] : memref<1x128xf32, #tpu.memory_space<vmem>>, vector<1x128xf32>
    %5 = vector.broadcast %4 : vector<1x128xf32> to vector<16x128xf32>
    %6 = arith.addf %3, %5 : vector<16x128xf32>
    %cst_5 = arith.constant 0.000000e+00 : f32
    %7 = vector.broadcast %cst_5 : f32 to vector<16x128xf32>
    %8 = arith.maximumf %6, %7 : vector<16x128xf32>
    %9 = arith.truncf %8 : vector<16x128xf32> to vector<16x128xbf16>
    %c0_6 = arith.constant 0 : index
    %c0_7 = arith.constant 0 : index
    %10 = vector.load %arg4[%c0_6, %c0_7] : memref<128x128xbf16, #tpu.memory_space<vmem>>, vector<128x128xbf16>
    %cst_8 = arith.constant dense<0.000000e+00> : vector<16x128xf32>
    %11 = tpu.matmul %9, %10, %cst_8 {dimension_numbers = #tpu.dot_dimension_numbers<[1], [0], [0], [1], [0, 0, 1, 1], [], []>} : vector<16x128xbf16>, vector<128x128xbf16>, vector<16x128xf32> -> vector<16x128xf32>
    %c0_9 = arith.constant 0 : index
    %c0_10 = arith.constant 0 : index
    %12 = vector.load %arg5[%c0_9, %c0_10] : memref<1x128xf32, #tpu.memory_space<vmem>>, vector<1x128xf32>
    %13 = vector.broadcast %12 : vector<1x128xf32> to vector<16x128xf32>
    %14 = arith.addf %11, %13 : vector<16x128xf32>
    %cst_11 = arith.constant 0.000000e+00 : f32
    %15 = vector.broadcast %cst_11 : f32 to vector<16x128xf32>
    %16 = arith.maximumf %14, %15 : vector<16x128xf32>
    %17 = arith.truncf %16 : vector<16x128xf32> to vector<16x128xbf16>
    %c0_12 = arith.constant 0 : index
    %c0_13 = arith.constant 0 : index
    %18 = vector.load %arg6[%c0_12, %c0_13] : memref<128x128xbf16, #tpu.memory_space<vmem>>, vector<128x128xbf16>
    %cst_14 = arith.constant dense<0.000000e+00> : vector<16x128xf32>
    %19 = tpu.matmul %17, %18, %cst_14 {dimension_numbers = #tpu.dot_dimension_numbers<[1], [0], [0], [1], [0, 0, 1, 1], [], []>} : vector<16x128xbf16>, vector<128x128xbf16>, vector<16x128xf32> -> vector<16x128xf32>
    %c0_15 = arith.constant 0 : index
    %c0_16 = arith.constant 0 : index
    %20 = vector.load %arg7[%c0_15, %c0_16] : memref<1x128xf32, #tpu.memory_space<vmem>>, vector<1x128xf32>
    %21 = vector.broadcast %20 : vector<1x128xf32> to vector<16x128xf32>
    %22 = arith.addf %19, %21 : vector<16x128xf32>
    %c0_17 = arith.constant 0 : index
    %c0_18 = arith.constant 0 : index
    %23 = vector.load %arg8[%c0_17, %c0_18] : memref<16x128xf32, #tpu.memory_space<vmem>>, vector<16x128xf32>
    tpu.vector_store %arg8[%c0_17, %c0_18], %22 {strides = array<i32>} : memref<16x128xf32, #tpu.memory_space<vmem>>, vector<16x128xf32>,
    return
  }
  func.func @transform_0(%arg0: i32) -> (i32, i32) {
    %c0_i32 = arith.constant 0 : i32
    %c0_i32_0 = arith.constant 0 : i32
    return %arg0, %c0_i32 : i32, i32
  }
  func.func @transform_1(%arg0: i32) -> (i32, i32) {
    %c0_i32 = arith.constant 0 : i32
    %c0_i32_0 = arith.constant 0 : i32
    %c0_i32_1 = arith.constant 0 : i32
    return %c0_i32, %c0_i32_0 : i32, i32
  }
  func.func @transform_2(%arg0: i32) -> (i32, i32) {
    %c0_i32 = arith.constant 0 : i32
    %c0_i32_0 = arith.constant 0 : i32
    %c0_i32_1 = arith.constant 0 : i32
    return %c0_i32, %c0_i32_0 : i32, i32
  }
  func.func @transform_3(%arg0: i32) -> (i32, i32) {
    %c0_i32 = arith.constant 0 : i32
    %c0_i32_0 = arith.constant 0 : i32
    %c0_i32_1 = arith.constant 0 : i32
    return %c0_i32, %c0_i32_0 : i32, i32
  }
  func.func @transform_4(%arg0: i32) -> (i32, i32) {
    %c0_i32 = arith.constant 0 : i32
    %c0_i32_0 = arith.constant 0 : i32
    %c0_i32_1 = arith.constant 0 : i32
    return %c0_i32, %c0_i32_0 : i32, i32
  }
  func.func @transform_5(%arg0: i32) -> (i32, i32) {
    %c0_i32 = arith.constant 0 : i32
    %c0_i32_0 = arith.constant 0 : i32
    %c0_i32_1 = arith.constant 0 : i32
    return %c0_i32, %c0_i32_0 : i32, i32
  }
  func.func @transform_6(%arg0: i32) -> (i32, i32) {
    %c0_i32 = arith.constant 0 : i32
    %c0_i32_0 = arith.constant 0 : i32
    %c0_i32_1 = arith.constant 0 : i32
    return %c0_i32, %c0_i32_0 : i32, i32
  }
  func.func @transform_7(%arg0: i32) -> (i32, i32) {
    %c0_i32 = arith.constant 0 : i32
    %c0_i32_0 = arith.constant 0 : i32
    return %arg0, %c0_i32 : i32, i32
  }
}

module attributes {stable_mosaic.version = 11 : i64} {
  func.func @kernel(%arg0: i32, %arg1: memref<16x16xf32, #tpu.memory_space<vmem>>, %arg2: memref<16x128xbf16, #tpu.memory_space<vmem>>, %arg3: memref<1x128xf32, #tpu.memory_space<vmem>>, %arg4: memref<128x128xbf16, #tpu.memory_space<vmem>>, %arg5: memref<1x128xf32, #tpu.memory_space<vmem>>, %arg6: memref<128x128xbf16, #tpu.memory_space<vmem>>, %arg7: memref<1x128xf32, #tpu.memory_space<vmem>>, %arg8: memref<16x128xf32, #tpu.memory_space<vmem>>) attributes {dimension_semantics = [#tpu.dimension_semantics<parallel>], iteration_bounds = array<i64: 1>, scalar_prefetch = 0 : i64, scratch_operands = 0 : i64, tpu.core_type = #tpu.core_type<tc>, window_params = [{transform_indices = @transform_0, window_bounds = array<i64: 16, 16>}, {pipeline_mode = #tpu.pipeline_mode<synchronous>, transform_indices = @transform_1, window_bounds = array<i64: 16, 128>}, {pipeline_mode = #tpu.pipeline_mode<synchronous>, transform_indices = @transform_2, window_bounds = array<i64: 1, 128>}, {pipeline_mode = #tpu.pipeline_mode<synchronous>, transform_indices = @transform_3, window_bounds = array<i64: 128, 128>}, {pipeline_mode = #tpu.pipeline_mode<synchronous>, transform_indices = @transform_4, window_bounds = array<i64: 1, 128>}, {pipeline_mode = #tpu.pipeline_mode<synchronous>, transform_indices = @transform_5, window_bounds = array<i64: 128, 128>}, {pipeline_mode = #tpu.pipeline_mode<synchronous>, transform_indices = @transform_6, window_bounds = array<i64: 1, 128>}, {transform_indices = @transform_7, window_bounds = array<i64: 16, 128>}]} {
    %c0 = arith.constant 0 : index
    %c0_0 = arith.constant 0 : index
    %0 = vector.load %arg1[%c0, %c0_0] : memref<16x16xf32, #tpu.memory_space<vmem>>, vector<16x16xf32>
    %1 = arith.truncf %0 : vector<16x16xf32> to vector<16x16xbf16>
    %c0_1 = arith.constant 0 : index
    %c0_2 = arith.constant 0 : index
    %2 = vector.load %arg2[%c0_1, %c0_2] : memref<16x128xbf16, #tpu.memory_space<vmem>>, vector<16x128xbf16>
    %cst = arith.constant dense<0.000000e+00> : vector<16x128xf32>
    %3 = tpu.matmul %1, %2, %cst {dimension_numbers = #tpu.dot_dimension_numbers<[1], [0], [0], [1], [0, 0, 1, 1], [], []>} : vector<16x16xbf16>, vector<16x128xbf16>, vector<16x128xf32> -> vector<16x128xf32>
    %c0_3 = arith.constant 0 : index
    %c0_4 = arith.constant 0 : index
    %4 = vector.load %arg3[%c0_3, %c0_4] : memref<1x128xf32, #tpu.memory_space<vmem>>, vector<1x128xf32>
    %5 = vector.broadcast %4 : vector<1x128xf32> to vector<16x128xf32>
    %6 = arith.addf %3, %5 : vector<16x128xf32>
    %cst_5 = arith.constant 0.000000e+00 : f32
    %7 = vector.broadcast %cst_5 : f32 to vector<16x128xf32>
    %8 = arith.maximumf %6, %7 : vector<16x128xf32>
    %9 = arith.truncf %8 : vector<16x128xf32> to vector<16x128xbf16>
    %c0_6 = arith.constant 0 : index
    %c0_7 = arith.constant 0 : index
    %10 = vector.load %arg4[%c0_6, %c0_7] : memref<128x128xbf16, #tpu.memory_space<vmem>>, vector<128x128xbf16>
    %cst_8 = arith.constant dense<0.000000e+00> : vector<16x128xf32>
    %11 = tpu.matmul %9, %10, %cst_8 {dimension_numbers = #tpu.dot_dimension_numbers<[1], [0], [0], [1], [0, 0, 1, 1], [], []>} : vector<16x128xbf16>, vector<128x128xbf16>, vector<16x128xf32> -> vector<16x128xf32>
    %c0_9 = arith.constant 0 : index
    %c0_10 = arith.constant 0 : index
    %12 = vector.load %arg5[%c0_9, %c0_10] : memref<1x128xf32, #tpu.memory_space<vmem>>, vector<1x128xf32>
    %13 = vector.broadcast %12 : vector<1x128xf32> to vector<16x128xf32>
    %14 = arith.addf %11, %13 : vector<16x128xf32>
    %cst_11 = arith.constant 0.000000e+00 : f32
    %15 = vector.broadcast %cst_11 : f32 to vector<16x128xf32>
    %16 = arith.maximumf %14, %15 : vector<16x128xf32>
    %17 = arith.truncf %16 : vector<16x128xf32> to vector<16x128xbf16>
    %c0_12 = arith.constant 0 : index
    %c0_13 = arith.constant 0 : index
    %18 = vector.load %arg6[%c0_12, %c0_13] : memref<128x128xbf16, #tpu.memory_space<vmem>>, vector<128x128xbf16>
    %cst_14 = arith.constant dense<0.000000e+00> : vector<16x128xf32>
    %19 = tpu.matmul %17, %18, %cst_14 {dimension_numbers = #tpu.dot_dimension_numbers<[1], [0], [0], [1], [0, 0, 1, 1], [], []>} : vector<16x128xbf16>, vector<128x128xbf16>, vector<16x128xf32> -> vector<16x128xf32>
    %c0_15 = arith.constant 0 : index
    %c0_16 = arith.constant 0 : index
    %20 = vector.load %arg7[%c0_15, %c0_16] : memref<1x128xf32, #tpu.memory_space<vmem>>, vector<1x128xf32>
    %21 = vector.broadcast %20 : vector<1x128xf32> to vector<16x128xf32>
    %22 = arith.addf %19, %21 : vector<16x128xf32>
    %c0_17 = arith.constant 0 : index
    %c0_18 = arith.constant 0 : index
    %23 = vector.load %arg8[%c0_17, %c0_18] : memref<16x128xf32, #tpu.memory_space<vmem>>, vector<16x128xf32>
    tpu.vector_store %arg8[%c0_17, %c0_18], %22 {strides = array<i32>} : memref<16x128xf32, #tpu.memory_space<vmem>>, vector<16x128xf32>,
    return
  }
  func.func @transform_0(%arg0: i32) -> (i32, i32) {
    %c0_i32 = arith.constant 0 : i32
    %c0_i32_0 = arith.constant 0 : i32
    return %arg0, %c0_i32 : i32, i32
  }
  func.func @transform_1(%arg0: i32) -> (i32, i32) {
    %c0_i32 = arith.constant 0 : i32
    %c0_i32_0 = arith.constant 0 : i32
    %c0_i32_1 = arith.constant 0 : i32
    return %c0_i32, %c0_i32_0 : i32, i32
  }
  func.func @transform_2(%arg0: i32) -> (i32, i32) {
    %c0_i32 = arith.constant 0 : i32
    %c0_i32_0 = arith.constant 0 : i32
    %c0_i32_1 = arith.constant 0 : i32
    return %c0_i32, %c0_i32_0 : i32, i32
  }
  func.func @transform_3(%arg0: i32) -> (i32, i32) {
    %c0_i32 = arith.constant 0 : i32
    %c0_i32_0 = arith.constant 0 : i32
    %c0_i32_1 = arith.constant 0 : i32
    return %c0_i32, %c0_i32_0 : i32, i32
  }
  func.func @transform_4(%arg0: i32) -> (i32, i32) {
    %c0_i32 = arith.constant 0 : i32
    %c0_i32_0 = arith.constant 0 : i32
    %c0_i32_1 = arith.constant 0 : i32
    return %c0_i32, %c0_i32_0 : i32, i32
  }
  func.func @transform_5(%arg0: i32) -> (i32, i32) {
    %c0_i32 = arith.constant 0 : i32
    %c0_i32_0 = arith.constant 0 : i32
    %c0_i32_1 = arith.constant 0 : i32
    return %c0_i32, %c0_i32_0 : i32, i32
  }
  func.func @transform_6(%arg0: i32) -> (i32, i32) {
    %c0_i32 = arith.constant 0 : i32
    %c0_i32_0 = arith.constant 0 : i32
    %c0_i32_1 = arith.constant 0 : i32
    return %c0_i32, %c0_i32_0 : i32, i32
  }
  func.func @transform_7(%arg0: i32) -> (i32, i32) {
    %c0_i32 = arith.constant 0 : i32
    %c0_i32_0 = arith.constant 0 : i32
    return %arg0, %c0_i32 : i32, i32
  }
}

</mosaic_0001>

<llo_original>
// kernel: tpu_custom_call.1
$region0: #{tpu_custom_call.1}
  #allocation0 [shape = 'u32[]', space=smem, size = 0x4, offset = 0x4, fixed_abs, tag = 'smem constant byte address 0x4 - core index']
  #allocation1 [shape = 'u32[72,128]{1,0:T(1,128)}', space=vmem, size = 0x9000, scoped, tag = 'internal scratch']
  %s0 = inlined_call_operand.hbm [shape: f32[16,16], index: 0, kind: input, shape index: {}]
  %s1 = inlined_call_operand.hbm [shape: bf16[16,128], index: 1, kind: input, shape index: {}]
  %s2 = inlined_call_operand.vmem [shape: f32[1,128], index: 2, kind: input, shape index: {}]
  %s3 = inlined_call_operand.hbm [shape: bf16[128,128], index: 3, kind: input, shape index: {}]
  %s4 = inlined_call_operand.vmem [shape: f32[1,128], index: 4, kind: input, shape index: {}]
  %s5 = inlined_call_operand.hbm [shape: bf16[128,128], index: 5, kind: input, shape index: {}]
  %s6 = inlined_call_operand.vmem [shape: f32[1,128], index: 6, kind: input, shape index: {}]
  %s7 = inlined_call_operand.hbm [shape: f32[16,128], index: 7, kind: output, shape index: {}]
  %s8 = sld [smem:[#allocation0]]
  $region54: #{tpu_custom_call.1} parent=0
    _
  %s10 = ssub.s32 1, %s8
  %s11 = scalar_select 0, %s10, %s8
  $region1: #{tpu_custom_call.1} parent=0
    #allocation2 [shape = 'u8[8192]{0}', space=vmem, size = 0x2000, scoped, tag = 'input window, operand 0, single buffered']
    #allocation3 [shape = 's32[1]{0}', space=sflag, size = 0x4, scoped, tag = 'scoped memory for tpu_custom_call.1']
    #allocation4 [shape = 's32[1]{0}', space=sflag, size = 0x4, scoped, tag = 'scoped memory for tpu_custom_call.1']
    #allocation5 [shape = 'u8[4096]{0}', space=vmem, size = 0x1000, scoped, tag = 'input window, operand 1, single buffered']
    #allocation6 [shape = 's32[1]{0}', space=sflag, size = 0x4, scoped, tag = 'scoped memory for tpu_custom_call.1']
    #allocation7 [shape = 'u8[32768]{0}', space=vmem, size = 0x8000, scoped, tag = 'input window, operand 3, single buffered']
    #allocation8 [shape = 'u8[32768]{0}', space=vmem, size = 0x8000, scoped, tag = 'input window, operand 5, single buffered']
    #allocation9 [shape = 's32[1]{0}', space=sflag, size = 0x4, scoped, tag = 'scoped memory for tpu_custom_call.1']
    #allocation10 [shape = 'u8[8192]{0}', space=vmem, size = 0x2000, scoped, tag = 'output window, operand 0, single buffered']
    %12 = vsyncpa [#allocation3], 0
    %13 = vsyncpa [#allocation6], 0
    %14 = vsyncpa [#allocation9], 0
    %15 = vsyncpa [#allocation4], 0
    // Predicated region
    $region2: #{tpu_custom_call.1} parent=1 // pred_check
      _
    $region3: #{tpu_custom_call.1} parent=1 // pred_check_branch
      %17 = sbr.rel (0) target = $region5
    $region4: #{tpu_custom_call.1} parent=1 // pred_region
      %19 = vsyncadd [#allocation3], 0
      %s20 = sshll.u32 %s0, 4
      %s21 = int_to_ptr.hbm [resolvable:$true] %s20
      %s22 = sshll.u32 [#allocation2], 4
      %s23 = int_to_ptr.vmem [resolvable:$true] %s22
      %28 = dma.hbm_to_vmem [thread:$0]  %s21, 256, %s23, [#allocation3], 128, 128, 8
    $region5: #{tpu_custom_call.1} parent=1 // pred_fallthru
      _
    // Predicated region
    $region6: #{tpu_custom_call.1} parent=1 // pred_check
      _
    $region7: #{tpu_custom_call.1} parent=1 // pred_check_branch
      %30 = sbr.rel (0) target = $region9
    $region8: #{tpu_custom_call.1} parent=1 // pred_region
      %32 = vsyncadd [#allocation6], 0
      %s33 = sshll.u32 %s1, 4
      %s34 = int_to_ptr.hbm [resolvable:$true] %s33
      %s35 = sshll.u32 [#allocation5], 4
      %s36 = int_to_ptr.vmem [resolvable:$true] %s35
      %41 = dma.hbm_to_vmem [thread:$0]  %s34, 128, %s36, [#allocation6], 64, 64, 4
    $region9: #{tpu_custom_call.1} parent=1 // pred_fallthru
      _
    // Predicated region
    $region10: #{tpu_custom_call.1} parent=1 // pred_check
      _
    $region11: #{tpu_custom_call.1} parent=1 // pred_check_branch
      %43 = sbr.rel (0) target = $region13
    $region12: #{tpu_custom_call.1} parent=1 // pred_region
      _
    $region13: #{tpu_custom_call.1} parent=1 // pred_fallthru
      _
    // Predicated region
    $region14: #{tpu_custom_call.1} parent=1 // pred_check
      _
    $region15: #{tpu_custom_call.1} parent=1 // pred_check_branch
      %45 = sbr.rel (0) target = $region17
    $region16: #{tpu_custom_call.1} parent=1 // pred_region
      %47 = vsyncadd [#allocation6], 0
      %s48 = sshll.u32 %s3, 4
      %s49 = int_to_ptr.hbm [resolvable:$true] %s48
      %s50 = sshll.u32 [#allocation7], 4
      %s51 = int_to_ptr.vmem [resolvable:$true] %s50
      %56 = dma.hbm_to_vmem [thread:$0]  %s49, 1024, %s51, [#allocation6], 64, 64, 4
    $region17: #{tpu_custom_call.1} parent=1 // pred_fallthru
      _
    // Predicated region
    $region18: #{tpu_custom_call.1} parent=1 // pred_check
      _
    $region19: #{tpu_custom_call.1} parent=1 // pred_check_branch
      %58 = sbr.rel (0) target = $region21
    $region20: #{tpu_custom_call.1} parent=1 // pred_region
      _
    $region21: #{tpu_custom_call.1} parent=1 // pred_fallthru
      _
    // Predicated region
    $region22: #{tpu_custom_call.1} parent=1 // pred_check
      _
    $region23: #{tpu_custom_call.1} parent=1 // pred_check_branch
      %60 = sbr.rel (0) target = $region25
    $region24: #{tpu_custom_call.1} parent=1 // pred_region
      %62 = vsyncadd [#allocation9], 0
      %s63 = sshll.u32 %s5, 4
      %s64 = int_to_ptr.hbm [resolvable:$true] %s63
      %s65 = sshll.u32 [#allocation8], 4
      %s66 = int_to_ptr.vmem [resolvable:$true] %s65
      %71 = dma.hbm_to_vmem [thread:$0]  %s64, 1024, %s66, [#allocation9], 64, 64, 4
    $region25: #{tpu_custom_call.1} parent=1 // pred_fallthru
      _
    // Predicated region
    $region26: #{tpu_custom_call.1} parent=1 // pred_check
      _
    $region27: #{tpu_custom_call.1} parent=1 // pred_check_branch
      %73 = sbr.rel (0) target = $region29
    $region28: #{tpu_custom_call.1} parent=1 // pred_region
      _
    $region29: #{tpu_custom_call.1} parent=1 // pred_fallthru
      _
    // Predicated region
    $region30: #{tpu_custom_call.1} parent=1 // pred_check
      _
    $region31: #{tpu_custom_call.1} parent=1 // pred_check_branch
      %75 = sbr.rel (0) target = $region33
    $region32: #{tpu_custom_call.1} parent=1 // pred_region
      %77 = dma.done [#allocation3], 256
    $region33: #{tpu_custom_call.1} parent=1 // pred_fallthru
      _
    // Predicated region
    $region34: #{tpu_custom_call.1} parent=1 // pred_check
      _
    $region35: #{tpu_custom_call.1} parent=1 // pred_check_branch
      %79 = sbr.rel (0) target = $region37
    $region36: #{tpu_custom_call.1} parent=1 // pred_region
      %81 = dma.done [#allocation6], 128
    $region37: #{tpu_custom_call.1} parent=1 // pred_fallthru
      _
    // Predicated region
    $region38: #{tpu_custom_call.1} parent=1 // pred_check
      _
    $region39: #{tpu_custom_call.1} parent=1 // pred_check_branch
      %83 = sbr.rel (0) target = $region41
    $region40: #{tpu_custom_call.1} parent=1 // pred_region
      %85 = dma.done [#allocation6], 1024
    $region41: #{tpu_custom_call.1} parent=1 // pred_fallthru
      _
    // Predicated region
    $region42: #{tpu_custom_call.1} parent=1 // pred_check
      _
    $region43: #{tpu_custom_call.1} parent=1 // pred_check_branch
      %87 = sbr.rel (0) target = $region45
    $region44: #{tpu_custom_call.1} parent=1 // pred_region
      %89 = dma.done [#allocation9], 1024
    $region45: #{tpu_custom_call.1} parent=1 // pred_fallthru
      _
    %v91 = vld [vmem:[#allocation2] sm:$0xff]
    %v92 = vld [vmem:[#allocation2 + $0x8] sm:$0xff]
    %v93 = vpack.c.bf16 %v92, %v91
    %v94 = vld [vmem:[#allocation5] sm:$0xf]
    %v95 = vld [vmem:[#allocation5 + $0x4] sm:$0xf]
    %v96 = vld [vmem:[%s2] sm:$0x1]
    %v98 = vperm.slane %v96, 0
    %v102 = vunpack.c.l.b16 %v94
    %v103 = vunpack.c.l.b16 %v95
    %v104 = vpack.c.b16 %v103, %v102
    %vm106 = vcmask 130048
    %v108 = vsel %vm106, %v93, 0
    %110 = vmatpush.bf16.msra.mxu0 0
    %111 = vmatpush.bf16.msra.mxu0 0
    %112 = vmatpush.bf16.msra.mxu0 0
    %113 = vmatpush.bf16.msra.mxu0 0
    %114 = vmatpush.bf16.msra.mxu0 0
    %115 = vmatpush.bf16.msra.mxu0 0
    %116 = vmatpush.bf16.msra.mxu0 0
    %117 = vmatpush.bf16.msra.mxu0 %v104
    %118 = vmatmul.bf16.gmra.mxu0 %v108
    %v119 = vpop.f32.mrf.mxu0
    %v120 = vadd.f32 %v98, %v119
    %v121 = vpop.f32.mrf.mxu0
    %v122 = vadd.f32 %v98, %v121
    %123 = vdwg.mxu0
    %v124 = vmax.f32 %v120, 0.0
    %v125 = vmax.f32 %v122, 0.0
    %v126 = vpack.c.bf16 %v125, %v124
    %v127 = vld [vmem:[#allocation7] sm:$0xf]
    %v128 = vld [vmem:[#allocation7 + $0x4] sm:$0xf]
    %v129 = vld [vmem:[#allocation7 + $0x8] sm:$0xf]
    %v130 = vld [vmem:[#allocation7 + $0xc] sm:$0xf]
    %v131 = vld [vmem:[#allocation7 + $0x10] sm:$0xf]
    %v132 = vld [vmem:[#allocation7 + $0x14] sm:$0xf]
    %v133 = vld [vmem:[#allocation7 + $0x18] sm:$0xf]
    %v134 = vld [vmem:[#allocation7 + $0x1c] sm:$0xf]
    %v135 = vld [vmem:[#allocation7 + $0x20] sm:$0xf]
    %v136 = vld [vmem:[#allocation7 + $0x24] sm:$0xf]
    %v137 = vld [vmem:[#allocation7 + $0x28] sm:$0xf]
    %v138 = vld [vmem:[#allocation7 + $0x2c] sm:$0xf]
    %v139 = vld [vmem:[#allocation7 + $0x30] sm:$0xf]
    %v140 = vld [vmem:[#allocation7 + $0x34] sm:$0xf]
    %v141 = vld [vmem:[#allocation7 + $0x38] sm:$0xf]
    %v142 = vld [vmem:[#allocation7 + $0x3c] sm:$0xf]
    %v143 = vld [vmem:[%s4] sm:$0x1]
    %v145 = vperm.slane %v143, 0
    %v163 = vunpack.c.l.b16 %v127
    %v164 = vunpack.c.l.b16 %v128
    %v165 = vunpack.c.l.b16 %v129
    %v166 = vunpack.c.l.b16 %v130
    %v167 = vunpack.c.l.b16 %v131
    %v168 = vunpack.c.l.b16 %v132
    %v169 = vunpack.c.l.b16 %v133
    %v170 = vunpack.c.l.b16 %v134
    %v171 = vunpack.c.l.b16 %v135
    %v172 = vunpack.c.l.b16 %v136
    %v173 = vunpack.c.l.b16 %v137
    %v174 = vunpack.c.l.b16 %v138
    %v175 = vunpack.c.l.b16 %v139
    %v176 = vunpack.c.l.b16 %v140
    %v177 = vunpack.c.l.b16 %v141
    %v178 = vunpack.c.l.b16 %v142
    %v179 = vpack.c.b16 %v164, %v163
    %v180 = vpack.c.b16 %v166, %v165
    %v181 = vpack.c.b16 %v168, %v167
    %v182 = vpack.c.b16 %v170, %v169
    %v183 = vpack.c.b16 %v172, %v171
    %v184 = vpack.c.b16 %v174, %v173
    %v185 = vpack.c.b16 %v176, %v175
    %v186 = vpack.c.b16 %v178, %v177
    %195 = vmatpush.bf16.msra.mxu0 %v186
    %196 = vmatpush.bf16.msra.mxu0 %v185
    %197 = vmatpush.bf16.msra.mxu0 %v184
    %198 = vmatpush.bf16.msra.mxu0 %v183
    %199 = vmatpush.bf16.msra.mxu0 %v182
    %200 = vmatpush.bf16.msra.mxu0 %v181
    %201 = vmatpush.bf16.msra.mxu0 %v180
    %202 = vmatpush.bf16.msra.mxu0 %v179
    %203 = vmatmul.bf16.gmra.mxu0 %v126
    %v204 = vpop.f32.mrf.mxu0
    %v205 = vadd.f32 %v145, %v204
    %v206 = vpop.f32.mrf.mxu0
    %v207 = vadd.f32 %v145, %v206
    %208 = vdwg.mxu0
    %v209 = vmax.f32 %v205, 0.0
    %v210 = vmax.f32 %v207, 0.0
    %v211 = vpack.c.bf16 %v210, %v209
    %v212 = vld [vmem:[#allocation8] sm:$0xf]
    %v213 = vld [vmem:[#allocation8 + $0x4] sm:$0xf]
    %v214 = vld [vmem:[#allocation8 + $0x8] sm:$0xf]
    %v215 = vld [vmem:[#allocation8 + $0xc] sm:$0xf]
    %v216 = vld [vmem:[#allocation8 + $0x10] sm:$0xf]
    %v217 = vld [vmem:[#allocation8 + $0x14] sm:$0xf]
    %v218 = vld [vmem:[#allocation8 + $0x18] sm:$0xf]
    %v219 = vld [vmem:[#allocation8 + $0x1c] sm:$0xf]
    %v220 = vld [vmem:[#allocation8 + $0x20] sm:$0xf]
    %v221 = vld [vmem:[#allocation8 + $0x24] sm:$0xf]
    %v222 = vld [vmem:[#allocation8 + $0x28] sm:$0xf]
    %v223 = vld [vmem:[#allocation8 + $0x2c] sm:$0xf]
    %v224 = vld [vmem:[#allocation8 + $0x30] sm:$0xf]
    %v225 = vld [vmem:[#allocation8 + $0x34] sm:$0xf]
    %v226 = vld [vmem:[#allocation8 + $0x38] sm:$0xf]
    %v227 = vld [vmem:[#allocation8 + $0x3c] sm:$0xf]
    %v228 = vld [vmem:[%s6] sm:$0x1]
    %v230 = vperm.slane %v228, 0
    %v248 = vunpack.c.l.b16 %v212
    %v249 = vunpack.c.l.b16 %v213
    %v250 = vunpack.c.l.b16 %v214
    %v251 = vunpack.c.l.b16 %v215
    %v252 = vunpack.c.l.b16 %v216
    %v253 = vunpack.c.l.b16 %v217
    %v254 = vunpack.c.l.b16 %v218
    %v255 = vunpack.c.l.b16 %v219
    %v256 = vunpack.c.l.b16 %v220
    %v257 = vunpack.c.l.b16 %v221
    %v258 = vunpack.c.l.b16 %v222
    %v259 = vunpack.c.l.b16 %v223
    %v260 = vunpack.c.l.b16 %v224
    %v261 = vunpack.c.l.b16 %v225
    %v262 = vunpack.c.l.b16 %v226
    %v263 = vunpack.c.l.b16 %v227
    %v264 = vpack.c.b16 %v249, %v248
    %v265 = vpack.c.b16 %v251, %v250
    %v266 = vpack.c.b16 %v253, %v252
    %v267 = vpack.c.b16 %v255, %v254
    %v268 = vpack.c.b16 %v257, %v256
    %v269 = vpack.c.b16 %v259, %v258
    %v270 = vpack.c.b16 %v261, %v260
    %v271 = vpack.c.b16 %v263, %v262
    %280 = vmatpush.bf16.msra.mxu0 %v271
    %281 = vmatpush.bf16.msra.mxu0 %v270
    %282 = vmatpush.bf16.msra.mxu0 %v269
    %283 = vmatpush.bf16.msra.mxu0 %v268
    %284 = vmatpush.bf16.msra.mxu0 %v267
    %285 = vmatpush.bf16.msra.mxu0 %v266
    %286 = vmatpush.bf16.msra.mxu0 %v265
    %287 = vmatpush.bf16.msra.mxu0 %v264
    %288 = vmatmul.bf16.gmra.mxu0 %v211
    %v289 = vpop.f32.mrf.mxu0
    %v290 = vadd.f32 %v230, %v289
    %v291 = vpop.f32.mrf.mxu0
    %v292 = vadd.f32 %v230, %v291
    %293 = vdwg.mxu0
    %294 = vst [vmem:[#allocation10] sm:$0xff] %v290
    %295 = vst [vmem:[#allocation10 + $0x8] sm:$0xff] %v292
    // Predicated region
    $region46: #{tpu_custom_call.1} parent=1 // pred_check
      _
    $region47: #{tpu_custom_call.1} parent=1 // pred_check_branch
      %297 = sbr.rel (0) target = $region49
    $region48: #{tpu_custom_call.1} parent=1 // pred_region
      %299 = vsyncadd [#allocation4], 0
      %s300 = sshll.u32 [#allocation10], 4
      %s301 = int_to_ptr.vmem [resolvable:$true] %s300
      %s302 = sshll.u32 %s7, 4
      %s303 = int_to_ptr.hbm [resolvable:$true] %s302
      %308 = dma.vmem_to_hbm [thread:$0]  %s301, 256, %s303, [#allocation4], 128, 128, 8
    $region49: #{tpu_custom_call.1} parent=1 // pred_fallthru
      _
    // Predicated region
    $region50: #{tpu_custom_call.1} parent=1 // pred_check
      _
    $region51: #{tpu_custom_call.1} parent=1 // pred_check_branch
      %310 = sbr.rel (0) target = $region53
    $region52: #{tpu_custom_call.1} parent=1 // pred_region
      %312 = dma.done [#allocation4], 256
    $region53: #{tpu_custom_call.1} parent=1 // pred_fallthru
      _
    %313 = vsyncpa [#allocation3], 1
    %314 = vsyncpa [#allocation6], 1
    %315 = vsyncpa [#allocation9], 1
    %316 = vsyncpa [#allocation4], 1

// kernel: tpu_custom_call.1
$region0: #{tpu_custom_call.1}
  #allocation0 [shape = 'u32[]', space=smem, size = 0x4, offset = 0x4, fixed_abs, tag = 'smem constant byte address 0x4 - core index']
  #allocation1 [shape = 'u32[72,128]{1,0:T(1,128)}', space=vmem, size = 0x9000, scoped, tag = 'internal scratch']
  %s0 = inlined_call_operand.hbm [shape: f32[16,16], index: 0, kind: input, shape index: {}]
  %s1 = inlined_call_operand.hbm [shape: bf16[16,128], index: 1, kind: input, shape index: {}]
  %s2 = inlined_call_operand.vmem [shape: f32[1,128], index: 2, kind: input, shape index: {}]
  %s3 = inlined_call_operand.hbm [shape: bf16[128,128], index: 3, kind: input, shape index: {}]
  %s4 = inlined_call_operand.vmem [shape: f32[1,128], index: 4, kind: input, shape index: {}]
  %s5 = inlined_call_operand.hbm [shape: bf16[128,128], index: 5, kind: input, shape index: {}]
  %s6 = inlined_call_operand.vmem [shape: f32[1,128], index: 6, kind: input, shape index: {}]
  %s7 = inlined_call_operand.hbm [shape: f32[16,128], index: 7, kind: output, shape index: {}]
  %s8 = sld [smem:[#allocation0]]
  $region54: #{tpu_custom_call.1} parent=0
    _
  %s10 = ssub.s32 1, %s8
  %s11 = scalar_select 0, %s10, %s8
  $region1: #{tpu_custom_call.1} parent=0
    #allocation2 [shape = 'u8[8192]{0}', space=vmem, size = 0x2000, scoped, tag = 'input window, operand 0, single buffered']
    #allocation3 [shape = 's32[1]{0}', space=sflag, size = 0x4, scoped, tag = 'scoped memory for tpu_custom_call.1']
    #allocation4 [shape = 's32[1]{0}', space=sflag, size = 0x4, scoped, tag = 'scoped memory for tpu_custom_call.1']
    #allocation5 [shape = 'u8[4096]{0}', space=vmem, size = 0x1000, scoped, tag = 'input window, operand 1, single buffered']
    #allocation6 [shape = 's32[1]{0}', space=sflag, size = 0x4, scoped, tag = 'scoped memory for tpu_custom_call.1']
    #allocation7 [shape = 'u8[32768]{0}', space=vmem, size = 0x8000, scoped, tag = 'input window, operand 3, single buffered']
    #allocation8 [shape = 'u8[32768]{0}', space=vmem, size = 0x8000, scoped, tag = 'input window, operand 5, single buffered']
    #allocation9 [shape = 's32[1]{0}', space=sflag, size = 0x4, scoped, tag = 'scoped memory for tpu_custom_call.1']
    #allocation10 [shape = 'u8[8192]{0}', space=vmem, size = 0x2000, scoped, tag = 'output window, operand 0, single buffered']
    %12 = vsyncpa [#allocation3], 0
    %13 = vsyncpa [#allocation6], 0
    %14 = vsyncpa [#allocation9], 0
    %15 = vsyncpa [#allocation4], 0
    // Predicated region
    $region2: #{tpu_custom_call.1} parent=1 // pred_check
      _
    $region3: #{tpu_custom_call.1} parent=1 // pred_check_branch
      %17 = sbr.rel (0) target = $region5
    $region4: #{tpu_custom_call.1} parent=1 // pred_region
      %19 = vsyncadd [#allocation3], 0
      %s20 = sshll.u32 %s0, 4
      %s21 = int_to_ptr.hbm [resolvable:$true] %s20
      %s22 = sshll.u32 [#allocation2], 4
      %s23 = int_to_ptr.vmem [resolvable:$true] %s22
      %28 = dma.hbm_to_vmem [thread:$0]  %s21, 256, %s23, [#allocation3], 128, 128, 8
    $region5: #{tpu_custom_call.1} parent=1 // pred_fallthru
      _
    // Predicated region
    $region6: #{tpu_custom_call.1} parent=1 // pred_check
      _
    $region7: #{tpu_custom_call.1} parent=1 // pred_check_branch
      %30 = sbr.rel (0) target = $region9
    $region8: #{tpu_custom_call.1} parent=1 // pred_region
      %32 = vsyncadd [#allocation6], 0
      %s33 = sshll.u32 %s1, 4
      %s34 = int_to_ptr.hbm [resolvable:$true] %s33
      %s35 = sshll.u32 [#allocation5], 4
      %s36 = int_to_ptr.vmem [resolvable:$true] %s35
      %41 = dma.hbm_to_vmem [thread:$0]  %s34, 128, %s36, [#allocation6], 64, 64, 4
    $region9: #{tpu_custom_call.1} parent=1 // pred_fallthru
      _
    // Predicated region
    $region10: #{tpu_custom_call.1} parent=1 // pred_check
      _
    $region11: #{tpu_custom_call.1} parent=1 // pred_check_branch
      %43 = sbr.rel (0) target = $region13
    $region12: #{tpu_custom_call.1} parent=1 // pred_region
      _
    $region13: #{tpu_custom_call.1} parent=1 // pred_fallthru
      _
    // Predicated region
    $region14: #{tpu_custom_call.1} parent=1 // pred_check
      _
    $region15: #{tpu_custom_call.1} parent=1 // pred_check_branch
      %45 = sbr.rel (0) target = $region17
    $region16: #{tpu_custom_call.1} parent=1 // pred_region
      %47 = vsyncadd [#allocation6], 0
      %s48 = sshll.u32 %s3, 4
      %s49 = int_to_ptr.hbm [resolvable:$true] %s48
      %s50 = sshll.u32 [#allocation7], 4
      %s51 = int_to_ptr.vmem [resolvable:$true] %s50
      %56 = dma.hbm_to_vmem [thread:$0]  %s49, 1024, %s51, [#allocation6], 64, 64, 4
    $region17: #{tpu_custom_call.1} parent=1 // pred_fallthru
      _
    // Predicated region
    $region18: #{tpu_custom_call.1} parent=1 // pred_check
      _
    $region19: #{tpu_custom_call.1} parent=1 // pred_check_branch
      %58 = sbr.rel (0) target = $region21
    $region20: #{tpu_custom_call.1} parent=1 // pred_region
      _
    $region21: #{tpu_custom_call.1} parent=1 // pred_fallthru
      _
    // Predicated region
    $region22: #{tpu_custom_call.1} parent=1 // pred_check
      _
    $region23: #{tpu_custom_call.1} parent=1 // pred_check_branch
      %60 = sbr.rel (0) target = $region25
    $region24: #{tpu_custom_call.1} parent=1 // pred_region
      %62 = vsyncadd [#allocation9], 0
      %s63 = sshll.u32 %s5, 4
      %s64 = int_to_ptr.hbm [resolvable:$true] %s63
      %s65 = sshll.u32 [#allocation8], 4
      %s66 = int_to_ptr.vmem [resolvable:$true] %s65
      %71 = dma.hbm_to_vmem [thread:$0]  %s64, 1024, %s66, [#allocation9], 64, 64, 4
    $region25: #{tpu_custom_call.1} parent=1 // pred_fallthru
      _
    // Predicated region
    $region26: #{tpu_custom_call.1} parent=1 // pred_check
      _
    $region27: #{tpu_custom_call.1} parent=1 // pred_check_branch
      %73 = sbr.rel (0) target = $region29
    $region28: #{tpu_custom_call.1} parent=1 // pred_region
      _
    $region29: #{tpu_custom_call.1} parent=1 // pred_fallthru
      _
    // Predicated region
    $region30: #{tpu_custom_call.1} parent=1 // pred_check
      _
    $region31: #{tpu_custom_call.1} parent=1 // pred_check_branch
      %75 = sbr.rel (0) target = $region33
    $region32: #{tpu_custom_call.1} parent=1 // pred_region
      %77 = dma.done [#allocation3], 256
    $region33: #{tpu_custom_call.1} parent=1 // pred_fallthru
      _
    // Predicated region
    $region34: #{tpu_custom_call.1} parent=1 // pred_check
      _
    $region35: #{tpu_custom_call.1} parent=1 // pred_check_branch
      %79 = sbr.rel (0) target = $region37
    $region36: #{tpu_custom_call.1} parent=1 // pred_region
      %81 = dma.done [#allocation6], 128
    $region37: #{tpu_custom_call.1} parent=1 // pred_fallthru
      _
    // Predicated region
    $region38: #{tpu_custom_call.1} parent=1 // pred_check
      _
    $region39: #{tpu_custom_call.1} parent=1 // pred_check_branch
      %83 = sbr.rel (0) target = $region41
    $region40: #{tpu_custom_call.1} parent=1 // pred_region
      %85 = dma.done [#allocation6], 1024
    $region41: #{tpu_custom_call.1} parent=1 // pred_fallthru
      _
    // Predicated region
    $region42: #{tpu_custom_call.1} parent=1 // pred_check
      _
    $region43: #{tpu_custom_call.1} parent=1 // pred_check_branch
      %87 = sbr.rel (0) target = $region45
    $region44: #{tpu_custom_call.1} parent=1 // pred_region
      %89 = dma.done [#allocation9], 1024
    $region45: #{tpu_custom_call.1} parent=1 // pred_fallthru
      _
    %v91 = vld [vmem:[#allocation2] sm:$0xff]
    %v92 = vld [vmem:[#allocation2 + $0x8] sm:$0xff]
    %v93 = vpack.c.bf16 %v92, %v91
    %v94 = vld [vmem:[#allocation5] sm:$0xf]
    %v95 = vld [vmem:[#allocation5 + $0x4] sm:$0xf]
    %v96 = vld [vmem:[%s2] sm:$0x1]
    %v98 = vperm.slane %v96, 0
    %v102 = vunpack.c.l.b16 %v94
    %v103 = vunpack.c.l.b16 %v95
    %v104 = vpack.c.b16 %v103, %v102
    %vm106 = vcmask 130048
    %v108 = vsel %vm106, %v93, 0
    %110 = vmatpush.bf16.msra.mxu0 0
    %111 = vmatpush.bf16.msra.mxu0 0
    %112 = vmatpush.bf16.msra.mxu0 0
    %113 = vmatpush.bf16.msra.mxu0 0
    %114 = vmatpush.bf16.msra.mxu0 0
    %115 = vmatpush.bf16.msra.mxu0 0
    %116 = vmatpush.bf16.msra.mxu0 0
    %117 = vmatpush.bf16.msra.mxu0 %v104
    %118 = vmatmul.bf16.gmra.mxu0 %v108
    %v119 = vpop.f32.mrf.mxu0
    %v120 = vadd.f32 %v98, %v119
    %v121 = vpop.f32.mrf.mxu0
    %v122 = vadd.f32 %v98, %v121
    %123 = vdwg.mxu0
    %v124 = vmax.f32 %v120, 0.0
    %v125 = vmax.f32 %v122, 0.0
    %v126 = vpack.c.bf16 %v125, %v124
    %v127 = vld [vmem:[#allocation7] sm:$0xf]
    %v128 = vld [vmem:[#allocation7 + $0x4] sm:$0xf]
    %v129 = vld [vmem:[#allocation7 + $0x8] sm:$0xf]
    %v130 = vld [vmem:[#allocation7 + $0xc] sm:$0xf]
    %v131 = vld [vmem:[#allocation7 + $0x10] sm:$0xf]
    %v132 = vld [vmem:[#allocation7 + $0x14] sm:$0xf]
    %v133 = vld [vmem:[#allocation7 + $0x18] sm:$0xf]
    %v134 = vld [vmem:[#allocation7 + $0x1c] sm:$0xf]
    %v135 = vld [vmem:[#allocation7 + $0x20] sm:$0xf]
    %v136 = vld [vmem:[#allocation7 + $0x24] sm:$0xf]
    %v137 = vld [vmem:[#allocation7 + $0x28] sm:$0xf]
    %v138 = vld [vmem:[#allocation7 + $0x2c] sm:$0xf]
    %v139 = vld [vmem:[#allocation7 + $0x30] sm:$0xf]
    %v140 = vld [vmem:[#allocation7 + $0x34] sm:$0xf]
    %v141 = vld [vmem:[#allocation7 + $0x38] sm:$0xf]
    %v142 = vld [vmem:[#allocation7 + $0x3c] sm:$0xf]
    %v143 = vld [vmem:[%s4] sm:$0x1]
    %v145 = vperm.slane %v143, 0
    %v163 = vunpack.c.l.b16 %v127
    %v164 = vunpack.c.l.b16 %v128
    %v165 = vunpack.c.l.b16 %v129
    %v166 = vunpack.c.l.b16 %v130
    %v167 = vunpack.c.l.b16 %v131
    %v168 = vunpack.c.l.b16 %v132
    %v169 = vunpack.c.l.b16 %v133
    %v170 = vunpack.c.l.b16 %v134
    %v171 = vunpack.c.l.b16 %v135
    %v172 = vunpack.c.l.b16 %v136
    %v173 = vunpack.c.l.b16 %v137
    %v174 = vunpack.c.l.b16 %v138
    %v175 = vunpack.c.l.b16 %v139
    %v176 = vunpack.c.l.b16 %v140
    %v177 = vunpack.c.l.b16 %v141
    %v178 = vunpack.c.l.b16 %v142
    %v179 = vpack.c.b16 %v164, %v163
    %v180 = vpack.c.b16 %v166, %v165
    %v181 = vpack.c.b16 %v168, %v167
    %v182 = vpack.c.b16 %v170, %v169
    %v183 = vpack.c.b16 %v172, %v171
    %v184 = vpack.c.b16 %v174, %v173
    %v185 = vpack.c.b16 %v176, %v175
    %v186 = vpack.c.b16 %v178, %v177
    %195 = vmatpush.bf16.msra.mxu0 %v186
    %196 = vmatpush.bf16.msra.mxu0 %v185
    %197 = vmatpush.bf16.msra.mxu0 %v184
    %198 = vmatpush.bf16.msra.mxu0 %v183
    %199 = vmatpush.bf16.msra.mxu0 %v182
    %200 = vmatpush.bf16.msra.mxu0 %v181
    %201 = vmatpush.bf16.msra.mxu0 %v180
    %202 = vmatpush.bf16.msra.mxu0 %v179
    %203 = vmatmul.bf16.gmra.mxu0 %v126
    %v204 = vpop.f32.mrf.mxu0
    %v205 = vadd.f32 %v145, %v204
    %v206 = vpop.f32.mrf.mxu0
    %v207 = vadd.f32 %v145, %v206
    %208 = vdwg.mxu0
    %v209 = vmax.f32 %v205, 0.0
    %v210 = vmax.f32 %v207, 0.0
    %v211 = vpack.c.bf16 %v210, %v209
    %v212 = vld [vmem:[#allocation8] sm:$0xf]
    %v213 = vld [vmem:[#allocation8 + $0x4] sm:$0xf]
    %v214 = vld [vmem:[#allocation8 + $0x8] sm:$0xf]
    %v215 = vld [vmem:[#allocation8 + $0xc] sm:$0xf]
    %v216 = vld [vmem:[#allocation8 + $0x10] sm:$0xf]
    %v217 = vld [vmem:[#allocation8 + $0x14] sm:$0xf]
    %v218 = vld [vmem:[#allocation8 + $0x18] sm:$0xf]
    %v219 = vld [vmem:[#allocation8 + $0x1c] sm:$0xf]
    %v220 = vld [vmem:[#allocation8 + $0x20] sm:$0xf]
    %v221 = vld [vmem:[#allocation8 + $0x24] sm:$0xf]
    %v222 = vld [vmem:[#allocation8 + $0x28] sm:$0xf]
    %v223 = vld [vmem:[#allocation8 + $0x2c] sm:$0xf]
    %v224 = vld [vmem:[#allocation8 + $0x30] sm:$0xf]
    %v225 = vld [vmem:[#allocation8 + $0x34] sm:$0xf]
    %v226 = vld [vmem:[#allocation8 + $0x38] sm:$0xf]
    %v227 = vld [vmem:[#allocation8 + $0x3c] sm:$0xf]
    %v228 = vld [vmem:[%s6] sm:$0x1]
    %v230 = vperm.slane %v228, 0
    %v248 = vunpack.c.l.b16 %v212
    %v249 = vunpack.c.l.b16 %v213
    %v250 = vunpack.c.l.b16 %v214
    %v251 = vunpack.c.l.b16 %v215
    %v252 = vunpack.c.l.b16 %v216
    %v253 = vunpack.c.l.b16 %v217
    %v254 = vunpack.c.l.b16 %v218
    %v255 = vunpack.c.l.b16 %v219
    %v256 = vunpack.c.l.b16 %v220
    %v257 = vunpack.c.l.b16 %v221
    %v258 = vunpack.c.l.b16 %v222
    %v259 = vunpack.c.l.b16 %v223
    %v260 = vunpack.c.l.b16 %v224
    %v261 = vunpack.c.l.b16 %v225
    %v262 = vunpack.c.l.b16 %v226
    %v263 = vunpack.c.l.b16 %v227
    %v264 = vpack.c.b16 %v249, %v248
    %v265 = vpack.c.b16 %v251, %v250
    %v266 = vpack.c.b16 %v253, %v252
    %v267 = vpack.c.b16 %v255, %v254
    %v268 = vpack.c.b16 %v257, %v256
    %v269 = vpack.c.b16 %v259, %v258
    %v270 = vpack.c.b16 %v261, %v260
    %v271 = vpack.c.b16 %v263, %v262
    %280 = vmatpush.bf16.msra.mxu0 %v271
    %281 = vmatpush.bf16.msra.mxu0 %v270
    %282 = vmatpush.bf16.msra.mxu0 %v269
    %283 = vmatpush.bf16.msra.mxu0 %v268
    %284 = vmatpush.bf16.msra.mxu0 %v267
    %285 = vmatpush.bf16.msra.mxu0 %v266
    %286 = vmatpush.bf16.msra.mxu0 %v265
    %287 = vmatpush.bf16.msra.mxu0 %v264
    %288 = vmatmul.bf16.gmra.mxu0 %v211
    %v289 = vpop.f32.mrf.mxu0
    %v290 = vadd.f32 %v230, %v289
    %v291 = vpop.f32.mrf.mxu0
    %v292 = vadd.f32 %v230, %v291
    %293 = vdwg.mxu0
    %294 = vst [vmem:[#allocation10] sm:$0xff] %v290
    %295 = vst [vmem:[#allocation10 + $0x8] sm:$0xff] %v292
    // Predicated region
    $region46: #{tpu_custom_call.1} parent=1 // pred_check
      _
    $region47: #{tpu_custom_call.1} parent=1 // pred_check_branch
      %297 = sbr.rel (0) target = $region49
    $region48: #{tpu_custom_call.1} parent=1 // pred_region
      %299 = vsyncadd [#allocation4], 0
      %s300 = sshll.u32 [#allocation10], 4
      %s301 = int_to_ptr.vmem [resolvable:$true] %s300
      %s302 = sshll.u32 %s7, 4
      %s303 = int_to_ptr.hbm [resolvable:$true] %s302
      %308 = dma.vmem_to_hbm [thread:$0]  %s301, 256, %s303, [#allocation4], 128, 128, 8
    $region49: #{tpu_custom_call.1} parent=1 // pred_fallthru
      _
    // Predicated region
    $region50: #{tpu_custom_call.1} parent=1 // pred_check
      _
    $region51: #{tpu_custom_call.1} parent=1 // pred_check_branch
      %310 = sbr.rel (0) target = $region53
    $region52: #{tpu_custom_call.1} parent=1 // pred_region
      %312 = dma.done [#allocation4], 256
    $region53: #{tpu_custom_call.1} parent=1 // pred_fallthru
      _
    %313 = vsyncpa [#allocation3], 1
    %314 = vsyncpa [#allocation6], 1
    %315 = vsyncpa [#allocation9], 1
    %316 = vsyncpa [#allocation4], 1

</llo_original>
